<compile_context>
chip_gen: v5e
topology: v5e:2x2
jax: 0.10.0
libtpu: 0.0.40
codegen_flags: <defaults>
</compile_context>

<pallas_src>
import functools

import jax
import jax.numpy as jnp
from jax.experimental import pallas as pl
from jax.experimental.pallas import tpu as pltpu


def _round_up(x: int, m: int) -> int:
    return (x + m - 1) // m * m


def _pick_tile_s(S: int, L_pad: int, H_pad: int) -> int:
    """Parallel-axis tile: big enough to amortize per-step overhead, small
    enough to fit the 32 MiB scoped-VMEM budget we request (safe on v7x's
    64 MiB physical / 32 MiB default), and >= 2 grid steps when S > 128 so the
    'parallel' axis actually shards across v7x's two TensorCores."""
    budget = 26 * 1024 * 1024
    # history + W are grid-invariant but double-buffered by default.
    fixed = 2 * (L_pad * H_pad + H_pad * H_pad) * 4
    if S > 128:
        tile = min(256, _round_up(-(-S // 2), 8))
    else:
        tile = _round_up(max(S, 1), 8)
    while tile > 8:
        # in/out double-buffers + ~3 (TILE_S, L_pad) f32 softmax temps.
        per_step = (2 * H_pad + 5 * L_pad) * tile * 4
        if fixed + per_step <= budget:
            break
        tile = max(8, (tile // 2) // 8 * 8)
    return tile


def _attn_general_kernel(out_state_ref, w_ref, hist_ref, o_ref, *, seq_len):
    # tmp = out_state @ W   (W untransposed -- see header note)        (tS, Hp)
    tmp = jnp.dot(
        out_state_ref[...], w_ref[...], preferred_element_type=jnp.float32
    )
    # energies = tmp @ history.T as an 'NT' matmul (contract last dims),
    # fed directly to the MXU with no relayout/transpose.              (tS, Lp)
    energies = jax.lax.dot_general(
        tmp,
        hist_ref[...],
        dimension_numbers=(((1,), (1,)), ((), ())),
        preferred_element_type=jnp.float32,
    )

    # Mask lane-padding columns (j >= true seq_len) before the softmax.
    # Static (trace-time) check: emitted only when padding actually exists.
    l_pad = o_ref.shape[-1]
    if seq_len < l_pad:
        col = jax.lax.broadcasted_iota(jnp.int32, energies.shape, 1)
        energies = jnp.where(col < seq_len, energies, jnp.float32(-1e30))

    # Numerically stable row-wise softmax over seq_len.  Exact divide: the
    # kernel is mem-bound so it is free, and rows sum to 1 to f32 ulp.
    m = jnp.max(energies, axis=-1, keepdims=True)
    e = jnp.exp(energies - m)
    l = jnp.sum(e, axis=-1, keepdims=True)
    o_ref[...] = (e * (1.0 / l)).astype(o_ref.dtype)


def attn_general(out_state, history, w, b=None, *, out_dtype=jnp.float32):
    """Pallas wrapper. out_state: (S, H), history: (L, H), w: (H, H), b: (H,).

    `b` is accepted for API parity with nn.Linear but is not used: the bias
    contributes a per-row constant to the energies and softmax is invariant
    to it (see header note)."""
    del b
    S, H = out_state.shape
    L, H2 = history.shape
    assert H == H2 and w.shape == (H, H)

    # Lane-dense layout: pad seq_len (output last dim) and hidden (lane dim of
    # every input / MXU contraction dim) to multiples of 128.
    L_pad = _round_up(L, 128)
    H_pad = _round_up(H, 128)
    TILE_S = _pick_tile_s(S, L_pad, H_pad)
    S_pad = _round_up(S, TILE_S)

    # Skip pads at trace time when already aligned (no extra HBM copies).
    if S_pad == S and H_pad == H:
        os_p = out_state
    else:
        os_p = jnp.pad(out_state, ((0, S_pad - S), (0, H_pad - H)))
    if L_pad == L and H_pad == H:
        hist_p = history
    else:
        hist_p = jnp.pad(history, ((0, L_pad - L), (0, H_pad - H)))
    w_p = w if H_pad == H else jnp.pad(w, ((0, H_pad - H), (0, H_pad - H)))

    grid = (S_pad // TILE_S,)

    out_padded = pl.pallas_call(
        functools.partial(_attn_general_kernel, seq_len=L),
        out_shape=jax.ShapeDtypeStruct((S_pad, L_pad), out_dtype),
        grid=grid,
        in_specs=[
            pl.BlockSpec((TILE_S, H_pad), lambda i: (i, 0)),   # out_state tile
            pl.BlockSpec((H_pad, H_pad), lambda i: (0, 0)),    # W (resident)
            pl.BlockSpec((L_pad, H_pad), lambda i: (0, 0)),    # history (resident)
        ],
        out_specs=pl.BlockSpec((TILE_S, L_pad), lambda i: (i, 0)),
        compiler_params=pltpu.CompilerParams(
            dimension_semantics=("parallel",),
            vmem_limit_bytes=32 * 1024 * 1024,
        ),
    )(os_p, w_p, hist_p)

    if S_pad == S and L_pad == L:
        return out_padded
    return out_padded[:S, :L]


def attn_general_ref(out_state, history, w, b):
    # Matches the PyTorch module: energy[i,j] = out_state[i] . (W h_j + b).
    proj = history @ w.T + b[None, :]
    energies = out_state @ proj.T
    return jax.nn.softmax(energies, axis=-1)


if __name__ == "__main__":
    hidden = 32
    state_len = 8
    seq_len = 8

    key = jax.random.PRNGKey(0)
    k_os, k_hist, k_w, k_b = jax.random.split(key, 4)

    out_state = jax.random.normal(k_os, (state_len, hidden), dtype=jnp.float32)
    history = jax.random.normal(k_hist, (seq_len, hidden), dtype=jnp.float32)

    # Deterministic nn.Linear-style init: U(-1/sqrt(H), 1/sqrt(H))
    bound = 1.0 / (hidden ** 0.5)
    w = jax.random.uniform(
        k_w, (hidden, hidden), minval=-bound, maxval=bound, dtype=jnp.float32
    )
    b = jax.random.uniform(
        k_b, (hidden,), minval=-bound, maxval=bound, dtype=jnp.float32
    )

    out = attn_general(out_state, history, w, b)
    out = jax.block_until_ready(out)

    ref = attn_general_ref(out_state, history, w, b)
    assert out.shape == (state_len, seq_len)
    assert jnp.allclose(out, ref, atol=2e-3, rtol=2e-3), (
        jnp.max(jnp.abs(out - ref))
    )
    # Rows of a softmax sum to 1 (normalization uses an exact divide now).
    assert jnp.allclose(
        jnp.sum(out, axis=-1), jnp.ones((state_len,)), atol=1e-4
    )

    print("KERNEL_OK")
</pallas_src>

<mosaic_0001>
module attributes {stable_mosaic.version = 11 : i64} {
  func.func @_attn_general_kernel(%arg0: i32, %arg1: memref<8x128xf32, #tpu.memory_space<vmem>>, %arg2: memref<128x128xf32, #tpu.memory_space<vmem>>, %arg3: memref<128x128xf32, #tpu.memory_space<vmem>>, %arg4: memref<8x128xf32, #tpu.memory_space<vmem>>) attributes {dimension_semantics = [#tpu.dimension_semantics<parallel>], iteration_bounds = array<i64: 1>, scalar_prefetch = 0 : i64, scratch_operands = 0 : i64, tpu.core_type = #tpu.core_type<tc>, window_params = [{transform_indices = @transform_0, window_bounds = array<i64: 8, 128>}, {pipeline_mode = #tpu.pipeline_mode<synchronous>, transform_indices = @transform_1, window_bounds = array<i64: 128, 128>}, {pipeline_mode = #tpu.pipeline_mode<synchronous>, transform_indices = @transform_2, window_bounds = array<i64: 128, 128>}, {transform_indices = @transform_3, window_bounds = array<i64: 8, 128>}]} {
    %c0 = arith.constant 0 : index
    %c0_0 = arith.constant 0 : index
    %0 = vector.load %arg1[%c0, %c0_0] : memref<8x128xf32, #tpu.memory_space<vmem>>, vector<8x128xf32>
    %c0_1 = arith.constant 0 : index
    %c0_2 = arith.constant 0 : index
    %1 = vector.load %arg2[%c0_1, %c0_2] : memref<128x128xf32, #tpu.memory_space<vmem>>, vector<128x128xf32>
    %cst = arith.constant dense<0.000000e+00> : vector<8x128xf32>
    %2 = tpu.matmul %0, %1, %cst {dimension_numbers = #tpu.dot_dimension_numbers<[1], [0], [0], [1], [0, 0, 1, 1], [], []>} : vector<8x128xf32>, vector<128x128xf32>, vector<8x128xf32> -> vector<8x128xf32>
    %c0_3 = arith.constant 0 : index
    %c0_4 = arith.constant 0 : index
    %3 = vector.load %arg3[%c0_3, %c0_4] : memref<128x128xf32, #tpu.memory_space<vmem>>, vector<128x128xf32>
    %cst_5 = arith.constant dense<0.000000e+00> : vector<8x128xf32>
    %4 = tpu.matmul %2, %3, %cst_5 {dimension_numbers = #tpu.dot_dimension_numbers<[1], [1], [0], [0], [0, 0, 1, 0], [], []>} : vector<8x128xf32>, vector<128x128xf32>, vector<8x128xf32> -> vector<8x128xf32>
    %5 = tpu.iota {dimensions = array<i32: 1>} : vector<8x128xi32>
    %c8_i32 = arith.constant 8 : i32
    %6 = vector.broadcast %c8_i32 : i32 to vector<8x128xi32>
    %7 = arith.cmpi slt, %5, %6 : vector<8x128xi32>
    %cst_6 = arith.constant -1.000000e+30 : f32
    %8 = vector.broadcast %cst_6 : f32 to vector<8x128xf32>
    %9 = arith.select %7, %4, %8 : vector<8x128xi1>, vector<8x128xf32>
    %cst_7 = arith.constant dense<0xFF800000> : vector<8xf32>
    %10 = vector.multi_reduction <maximumf>, %9, %cst_7 [1] : vector<8x128xf32> to vector<8xf32>
    %11 = vector.shape_cast %10 : vector<8xf32> to vector<8x1xf32>
    %12 = vector.broadcast %11 : vector<8x1xf32> to vector<8x128xf32>
    %13 = arith.subf %9, %12 : vector<8x128xf32>
    %14 = math.exp %13 : vector<8x128xf32>
    %cst_8 = arith.constant dense<0.000000e+00> : vector<8xf32>
    %15 = vector.multi_reduction <add>, %14, %cst_8 [1] : vector<8x128xf32> to vector<8xf32>
    %16 = vector.shape_cast %15 : vector<8xf32> to vector<8x1xf32>
    %cst_9 = arith.constant 1.000000e+00 : f32
    %17 = vector.broadcast %cst_9 : f32 to vector<8x1xf32>
    %18 = arith.divf %17, %16 : vector<8x1xf32>
    %19 = vector.broadcast %18 : vector<8x1xf32> to vector<8x128xf32>
    %20 = arith.mulf %14, %19 : vector<8x128xf32>
    %c0_10 = arith.constant 0 : index
    %c0_11 = arith.constant 0 : index
    %21 = vector.load %arg4[%c0_10, %c0_11] : memref<8x128xf32, #tpu.memory_space<vmem>>, vector<8x128xf32>
    tpu.vector_store %arg4[%c0_10, %c0_11], %20 {strides = array<i32>} : memref<8x128xf32, #tpu.memory_space<vmem>>, vector<8x128xf32>,
    return
  }
  func.func @transform_0(%arg0: i32) -> (i32, i32) {
    %c0_i32 = arith.constant 0 : i32
    %c0_i32_0 = arith.constant 0 : i32
    return %arg0, %c0_i32 : i32, i32
  }
  func.func @transform_1(%arg0: i32) -> (i32, i32) {
    %c0_i32 = arith.constant 0 : i32
    %c0_i32_0 = arith.constant 0 : i32
    %c0_i32_1 = arith.constant 0 : i32
    return %c0_i32, %c0_i32_0 : i32, i32
  }
  func.func @transform_2(%arg0: i32) -> (i32, i32) {
    %c0_i32 = arith.constant 0 : i32
    %c0_i32_0 = arith.constant 0 : i32
    %c0_i32_1 = arith.constant 0 : i32
    return %c0_i32, %c0_i32_0 : i32, i32
  }
  func.func @transform_3(%arg0: i32) -> (i32, i32) {
    %c0_i32 = arith.constant 0 : i32
    %c0_i32_0 = arith.constant 0 : i32
    return %arg0, %c0_i32 : i32, i32
  }
}

</mosaic_0001>

<llo_original>
// kernel: tpu_custom_call.1
$region0: #{tpu_custom_call.1}
  #allocation0 [shape = 'u32[]', space=smem, size = 0x4, offset = 0x4, fixed_abs, tag = 'smem constant byte address 0x4 - core index']
  #allocation1 [shape = 'u32[72,128]{1,0:T(1,128)}', space=vmem, size = 0x9000, scoped, tag = 'internal scratch']
  %s0 = inlined_call_operand.hbm [shape: f32[8,128], index: 0, kind: input, shape index: {}]
  %s1 = inlined_call_operand.hbm [shape: f32[128,128], index: 1, kind: input, shape index: {}]
  %s2 = inlined_call_operand.hbm [shape: f32[128,128], index: 2, kind: input, shape index: {}]
  %s3 = inlined_call_operand.hbm [shape: f32[8,128], index: 3, kind: output, shape index: {}]
  %s4 = sld [smem:[#allocation0]]
  $region34: #{tpu_custom_call.1} parent=0
    _
  %s6 = ssub.s32 1, %s4
  %s7 = scalar_select 0, %s6, %s4
  $region1: #{tpu_custom_call.1} parent=0
    #allocation2 [shape = 'u8[4096]{0}', space=vmem, size = 0x1000, scoped, tag = 'input window, operand 0, single buffered']
    #allocation3 [shape = 's32[1]{0}', space=sflag, size = 0x4, scoped, tag = 'scoped memory for tpu_custom_call.1']
    #allocation4 [shape = 's32[1]{0}', space=sflag, size = 0x4, scoped, tag = 'scoped memory for tpu_custom_call.1']
    #allocation5 [shape = 'u8[65536]{0}', space=vmem, size = 0x10000, scoped, tag = 'input window, operand 1, single buffered']
    #allocation6 [shape = 's32[1]{0}', space=sflag, size = 0x4, scoped, tag = 'scoped memory for tpu_custom_call.1']
    #allocation7 [shape = 'u8[65536]{0}', space=vmem, size = 0x10000, scoped, tag = 'input window, operand 2, single buffered']
    #allocation8 [shape = 'u8[4096]{0}', space=vmem, size = 0x1000, scoped, tag = 'output window, operand 0, single buffered']
    %8 = vsyncpa [#allocation3], 0
    %9 = vsyncpa [#allocation6], 0
    %10 = vsyncpa [#allocation4], 0
    // Predicated region
    $region2: #{tpu_custom_call.1} parent=1 // pred_check
      _
    $region3: #{tpu_custom_call.1} parent=1 // pred_check_branch
      %12 = sbr.rel (0) target = $region5
    $region4: #{tpu_custom_call.1} parent=1 // pred_region
      %14 = vsyncadd [#allocation3], 0
      %s16 = sshll.u32 %s0, 4
      %s17 = int_to_ptr.hbm [resolvable:$true] %s16
      %s18 = sshll.u32 [#allocation2], 4
      %s19 = int_to_ptr.vmem [resolvable:$true] %s18
      %21 = dma.hbm_to_vmem [thread:$0]  %s17, 128, %s19, [#allocation3]
    $region5: #{tpu_custom_call.1} parent=1 // pred_fallthru
      _
    // Predicated region
    $region6: #{tpu_custom_call.1} parent=1 // pred_check
      _
    $region7: #{tpu_custom_call.1} parent=1 // pred_check_branch
      %23 = sbr.rel (0) target = $region9
    $region8: #{tpu_custom_call.1} parent=1 // pred_region
      %25 = vsyncadd [#allocation6], 0
      %s26 = sshll.u32 %s1, 4
      %s27 = int_to_ptr.hbm [resolvable:$true] %s26
      %s28 = sshll.u32 [#allocation5], 4
      %s29 = int_to_ptr.vmem [resolvable:$true] %s28
      %34 = dma.hbm_to_vmem [thread:$0]  %s27, 2048, %s29, [#allocation6], 128, 128, 8
    $region9: #{tpu_custom_call.1} parent=1 // pred_fallthru
      _
    // Predicated region
    $region10: #{tpu_custom_call.1} parent=1 // pred_check
      _
    $region11: #{tpu_custom_call.1} parent=1 // pred_check_branch
      %36 = sbr.rel (0) target = $region13
    $region12: #{tpu_custom_call.1} parent=1 // pred_region
      %38 = vsyncadd [#allocation6], 0
      %s39 = sshll.u32 %s2, 4
      %s40 = int_to_ptr.hbm [resolvable:$true] %s39
      %s41 = sshll.u32 [#allocation7], 4
      %s42 = int_to_ptr.vmem [resolvable:$true] %s41
      %47 = dma.hbm_to_vmem [thread:$0]  %s40, 2048, %s42, [#allocation6], 128, 128, 8
    $region13: #{tpu_custom_call.1} parent=1 // pred_fallthru
      _
    // Predicated region
    $region14: #{tpu_custom_call.1} parent=1 // pred_check
      _
    $region15: #{tpu_custom_call.1} parent=1 // pred_check_branch
      %49 = sbr.rel (0) target = $region17
    $region16: #{tpu_custom_call.1} parent=1 // pred_region
      %51 = dma.done [#allocation3], 128
    $region17: #{tpu_custom_call.1} parent=1 // pred_fallthru
      _
    // Predicated region
    $region18: #{tpu_custom_call.1} parent=1 // pred_check
      _
    $region19: #{tpu_custom_call.1} parent=1 // pred_check_branch
      %53 = sbr.rel (0) target = $region21
    $region20: #{tpu_custom_call.1} parent=1 // pred_region
      %55 = dma.done [#allocation6], 2048
    $region21: #{tpu_custom_call.1} parent=1 // pred_fallthru
      _
    // Predicated region
    $region22: #{tpu_custom_call.1} parent=1 // pred_check
      _
    $region23: #{tpu_custom_call.1} parent=1 // pred_check_branch
      %57 = sbr.rel (0) target = $region25
    $region24: #{tpu_custom_call.1} parent=1 // pred_region
      %59 = dma.done [#allocation6], 2048
    $region25: #{tpu_custom_call.1} parent=1 // pred_fallthru
      _
    %v60 = vld [vmem:[#allocation2] sm:$0xff]
    %v61 = vld [vmem:[#allocation5] sm:$0xff]
    %v62 = vld [vmem:[#allocation5 + $0x8] sm:$0xff]
    %v63 = vld [vmem:[#allocation5 + $0x10] sm:$0xff]
    %v64 = vld [vmem:[#allocation5 + $0x18] sm:$0xff]
    %v65 = vld [vmem:[#allocation5 + $0x20] sm:$0xff]
    %v66 = vld [vmem:[#allocation5 + $0x28] sm:$0xff]
    %v67 = vld [vmem:[#allocation5 + $0x30] sm:$0xff]
    %v68 = vld [vmem:[#allocation5 + $0x38] sm:$0xff]
    %v69 = vld [vmem:[#allocation5 + $0x40] sm:$0xff]
    %v70 = vld [vmem:[#allocation5 + $0x48] sm:$0xff]
    %v71 = vld [vmem:[#allocation5 + $0x50] sm:$0xff]
    %v72 = vld [vmem:[#allocation5 + $0x58] sm:$0xff]
    %v73 = vld [vmem:[#allocation5 + $0x60] sm:$0xff]
    %v74 = vld [vmem:[#allocation5 + $0x68] sm:$0xff]
    %v75 = vld [vmem:[#allocation5 + $0x70] sm:$0xff]
    %v76 = vld [vmem:[#allocation5 + $0x78] sm:$0xff]
    %77 = vmatpush.msra.mxu0 %v76
    %78 = vmatpush.msra.mxu0 %v75
    %79 = vmatpush.msra.mxu0 %v74
    %80 = vmatpush.msra.mxu0 %v73
    %81 = vmatpush.msra.mxu0 %v72
    %82 = vmatpush.msra.mxu0 %v71
    %83 = vmatpush.msra.mxu0 %v70
    %84 = vmatpush.msra.mxu0 %v69
    %85 = vmatpush.msra.mxu0 %v68
    %86 = vmatpush.msra.mxu0 %v67
    %87 = vmatpush.msra.mxu0 %v66
    %88 = vmatpush.msra.mxu0 %v65
    %89 = vmatpush.msra.mxu0 %v64
    %90 = vmatpush.msra.mxu0 %v63
    %91 = vmatpush.msra.mxu0 %v62
    %92 = vmatpush.msra.mxu0 %v61
    %93 = vmatmul.f32.gmra.mxu0 %v60
    %v94 = vpop.f32.mrf.mxu0
    %v95 = vadd.f32 0.0, %v94
    %96 = vdwg.mxu0
    %v97 = vld [vmem:[#allocation7] sm:$0xff]
    %v98 = vld [vmem:[#allocation7 + $0x8] sm:$0xff]
    %v99 = vld [vmem:[#allocation7 + $0x10] sm:$0xff]
    %v100 = vld [vmem:[#allocation7 + $0x18] sm:$0xff]
    %v101 = vld [vmem:[#allocation7 + $0x20] sm:$0xff]
    %v102 = vld [vmem:[#allocation7 + $0x28] sm:$0xff]
    %v103 = vld [vmem:[#allocation7 + $0x30] sm:$0xff]
    %v104 = vld [vmem:[#allocation7 + $0x38] sm:$0xff]
    %v105 = vld [vmem:[#allocation7 + $0x40] sm:$0xff]
    %v106 = vld [vmem:[#allocation7 + $0x48] sm:$0xff]
    %v107 = vld [vmem:[#allocation7 + $0x50] sm:$0xff]
    %v108 = vld [vmem:[#allocation7 + $0x58] sm:$0xff]
    %v109 = vld [vmem:[#allocation7 + $0x60] sm:$0xff]
    %v110 = vld [vmem:[#allocation7 + $0x68] sm:$0xff]
    %v111 = vld [vmem:[#allocation7 + $0x70] sm:$0xff]
    %v112 = vld [vmem:[#allocation7 + $0x78] sm:$0xff]
    %113 = vmatpush.xpose.msra.mxu0 %v112
    %114 = vmatpush.xpose.msra.mxu0 %v111
    %115 = vmatpush.xpose.msra.mxu0 %v110
    %116 = vmatpush.xpose.msra.mxu0 %v109
    %117 = vmatpush.xpose.msra.mxu0 %v108
    %118 = vmatpush.xpose.msra.mxu0 %v107
    %119 = vmatpush.xpose.msra.mxu0 %v106
    %120 = vmatpush.xpose.msra.mxu0 %v105
    %121 = vmatpush.xpose.msra.mxu0 %v104
    %122 = vmatpush.xpose.msra.mxu0 %v103
    %123 = vmatpush.xpose.msra.mxu0 %v102
    %124 = vmatpush.xpose.msra.mxu0 %v101
    %125 = vmatpush.xpose.msra.mxu0 %v100
    %126 = vmatpush.xpose.msra.mxu0 %v99
    %127 = vmatpush.xpose.msra.mxu0 %v98
    %128 = vmatpush.xpose.msra.mxu0 %v97
    %129 = vmatmul.f32.gmra.mxu0 %v95
    %v130 = vpop.f32.mrf.mxu0
    %v131 = vadd.f32 0.0, %v130
    %132 = vdwg.mxu0
    %v133 = vlaneseq
    %v134 = vand.u32 %v133, 127
    %vm135 = vcmp.lt.s32.totalorder %v134, 8
    %v136 = vsel %vm135, %v131, -1e+30
    %137 = vmax.xlane.f32.xlu0 %v136
    %v138 = vpop.xlane.xlu0 %137
    %v139 = vsub.f32 %v136, %v138
    %v140 = vmul.f32 %v139, 1.442695
    %v141 = vpow.pop %v140
    %142 = vadd.xlane.f32.xlu0 %v141
    %v143 = vpop.xlane.xlu0 %142
    %v144 = vrcp.pop %v143
    %v145 = vmul.f32 %v143, %v144
    %v146 = vsub.f32 1.0, %v145
    %v147 = vmul.f32 %v144, %v146
    %v148 = vadd.f32 %v144, %v147
    %vm149 = vweird.f32 %v143
    %vm150 = vweird.f32 %v144
    %vm151 = vmor %vm149, %vm150
    %v152 = vsel %vm151, %v144, %v148
    %v153 = vand.u32 2147483647, %v143
    %vm154 = vcmp.eq.f32.partialorder %v153, 8.507059e+37
    %v155 = vand.u32 %v143, 2147483648
    %v156 = vor.u32 1.1754944e-38, %v155
    %v157 = vsel %vm154, %v156, %v152
    %v158 = vmul.f32 1.0, %v157
    %v159 = vmul.f32 %v141, %v158
    %160 = vst [vmem:[#allocation8] sm:$0xff] %v159
    // Predicated region
    $region26: #{tpu_custom_call.1} parent=1 // pred_check
      _
    $region27: #{tpu_custom_call.1} parent=1 // pred_check_branch
      %162 = sbr.rel (0) target = $region29
    $region28: #{tpu_custom_call.1} parent=1 // pred_region
      %164 = vsyncadd [#allocation4], 0
      %s166 = sshll.u32 [#allocation8], 4
      %s167 = int_to_ptr.vmem [resolvable:$true] %s166
      %s168 = sshll.u32 %s3, 4
      %s169 = int_to_ptr.hbm [resolvable:$true] %s168
      %171 = dma.vmem_to_hbm [thread:$0]  %s167, 128, %s169, [#allocation4]
    $region29: #{tpu_custom_call.1} parent=1 // pred_fallthru
      _
    // Predicated region
    $region30: #{tpu_custom_call.1} parent=1 // pred_check
      _
    $region31: #{tpu_custom_call.1} parent=1 // pred_check_branch
      %173 = sbr.rel (0) target = $region33
    $region32: #{tpu_custom_call.1} parent=1 // pred_region
      %175 = dma.done [#allocation4], 128
    $region33: #{tpu_custom_call.1} parent=1 // pred_fallthru
      _
    %176 = vsyncpa [#allocation3], 1
    %177 = vsyncpa [#allocation6], 1
    %178 = vsyncpa [#allocation4], 1

</llo_original>
